<compile_context>
chip_gen: v6e
topology: v6e:2x2x1
jax: 0.10.0
libtpu: 0.0.40
codegen_flags: <defaults>
</compile_context>

<pallas_src>
import functools
import math

import jax
import jax.numpy as jnp
from jax.experimental import pallas as pl
from jax.experimental.pallas import tpu as pltpu

LANE = 128     # lane padding of hidden/output widths (128 fills v5e MXU;
               # TODO(synk): make generation-aware and use 256 on v6e/v7x once compute-bound)
SUBLANE = 8    # batch tiles are multiples of 8 sublanes
DEFAULT_BLOCK_B = 256  # batch tile rows (pipelining / megacore sharding granularity)


def _round_up(n, m):
    return ((n + m - 1) // m) * m


# --------------------------------------------------------------------------
# Fused kernel: out = Ln(ReLU(...ReLU(L1(x))...)) entirely in VMEM/vregs.
# refs = (x_ref, w0_ref, b0_ref, w1_ref, b1_ref, ..., o_ref)
# --------------------------------------------------------------------------
def _mlp_fused_kernel(*refs, num_layers: int):
    x_ref = refs[0]
    o_ref = refs[-1]
    acc = x_ref[...]                                   # (TB, in_f) f32
    for i in range(num_layers):
        w = refs[1 + 2 * i][...]                       # (k_pad, out_pad) bf16
        b = refs[2 + 2 * i][...]                       # (1, out_pad) f32 — broadcasts
        # bf16 operands, f32 accumulation on the MXU; epilogue stays f32.
        acc = jnp.dot(acc.astype(w.dtype), w,
                      preferred_element_type=jnp.float32) + b
        if i < num_layers - 1:
            acc = jnp.maximum(acc, 0.0)                # ReLU on hidden layers only
    o_ref[...] = acc.astype(o_ref.dtype)


def mlp_fused(x, prepped_params, *, block_b=DEFAULT_BLOCK_B):
    """x: (B, in_f) f32, unpadded features.
    prepped_params: [(w (k_pad, out_pad) bf16, b (1, out_pad) f32), ...]."""
    B, in_f = x.shape
    assert in_f == prepped_params[0][0].shape[0], "x feature width mismatch"
    out_pad = prepped_params[-1][0].shape[1]
    num_layers = len(prepped_params)

    # Batch tile: multiple of 8 sublanes, capped by the (rounded-up) batch.
    tb = min(_round_up(max(B, 1), SUBLANE), _round_up(block_b, SUBLANE))
    b_pad = _round_up(B, tb)
    if b_pad != B:
        x = jnp.zeros((b_pad, in_f), x.dtype).at[:B].set(x)
    grid = (b_pad // tb,)

    flat_args = [x]
    in_specs = [pl.BlockSpec((tb, in_f), lambda i: (i, 0))]
    for w, b in prepped_params:
        flat_args.extend((w, b))
        # Constant index_map -> weights/biases fetched once, VMEM-resident.
        in_specs.append(pl.BlockSpec(w.shape, lambda i: (0, 0)))
        in_specs.append(pl.BlockSpec(b.shape, lambda i: (0, 0)))

    # Explicit VMEM budget: resident weights/biases (2x for buffering headroom)
    # + double-buffered x/out tiles, with slack; clamped to a safe range.
    resident = sum(int(w.size) * w.dtype.itemsize + int(b.size) * b.dtype.itemsize
                   for w, b in prepped_params)
    act_tiles = 2 * (tb * in_f + tb * out_pad) * 4
    vmem_limit = int(min(max(2 * resident + act_tiles + (8 << 20), 32 << 20), 100 << 20))
    # TODO(synk): if resident weights approach ~half of v7x's 64 MiB VMEM, switch to a
    # per-layer pltpu.emit_pipeline over weights instead of keeping them all resident.

    kernel = functools.partial(_mlp_fused_kernel, num_layers=num_layers)
    y = pl.pallas_call(
        kernel,
        out_shape=jax.ShapeDtypeStruct((b_pad, out_pad), jnp.float32),
        grid=grid,
        in_specs=in_specs,
        out_specs=pl.BlockSpec((tb, out_pad), lambda i: (i, 0)),
        compiler_params=pltpu.CompilerParams(
            dimension_semantics=("parallel",),
            vmem_limit_bytes=vmem_limit),
    )(*flat_args)
    return y[:B] if b_pad != B else y


# --------------------------------------------------------------------------
# Parameter init (matches weights_init: kaiming_uniform fan_in / relu, zero bias)
# and one-time prep (transpose + lane padding + bf16 cast) — off the hot path.
# --------------------------------------------------------------------------
def init_nn_params(key, input_size, output_size, hidden_sizes):
    """PyTorch-style params: list of (w (out,in), b (out,))."""
    sizes = [input_size] + list(hidden_sizes) + [output_size]
    params = []
    for i in range(len(sizes) - 1):
        fan_in, fan_out = sizes[i], sizes[i + 1]
        key, sub = jax.random.split(key)
        bound = math.sqrt(6.0 / fan_in)  # gain(relu)=sqrt(2); bound = sqrt(3)*gain/sqrt(fan_in)
        w = jax.random.uniform(sub, (fan_out, fan_in), jnp.float32, -bound, bound)
        b = jnp.zeros((fan_out,), jnp.float32)
        params.append((w, b))
    return params


def prepare_params_for_kernel(params, *, lane_pad=LANE, weights_dtype=jnp.bfloat16):
    """Transpose to (in, out), zero-pad OUT dims (and hidden K dims) to multiples
    of `lane_pad`, cast weights to `weights_dtype` (bf16), keep bias f32 (1, out_pad).
    The first layer's K dim is NOT padded so x can be passed at its true width.
    Done once; the forward path never transposes, pads or casts weights."""
    # TODO(synk): for v7x-targeted weight compression use fp8 (no int8 MXU path on v7x).
    prepped = []
    k_pad = params[0][0].shape[1]          # first-layer K stays at the true input width
    for w, b in params:
        out_f, in_f = w.shape
        out_pad = _round_up(out_f, lane_pad)
        w_io = jnp.transpose(w).astype(jnp.float32)            # (in, out)
        w_p = jnp.zeros((k_pad, out_pad), jnp.float32).at[:in_f, :out_f].set(w_io)
        b_p = jnp.zeros((1, out_pad), jnp.float32).at[0, :out_f].set(b)
        prepped.append((w_p.astype(weights_dtype), b_p))
        k_pad = out_pad
    return prepped


def nn_forward(prepped_params, x, *, output_size, block_b=DEFAULT_BLOCK_B):
    """Forward pass of NN (ReLU on all but the last layer), single fused kernel."""
    y_p = mlp_fused(x, prepped_params, block_b=block_b)
    # Output width is lane-padded; slice to the true width (cheap).  Consumers
    # that accept a 128-padded width can use mlp_fused() directly and skip this.
    return y_p[:, :output_size]


if __name__ == "__main__":
    key = jax.random.PRNGKey(0)
    batch = 8
    input_size = 32
    hidden_sizes = [64, 48]
    output_size = 16

    pkey, xkey = jax.random.split(key)
    params = init_nn_params(pkey, input_size, output_size, hidden_sizes)
    prepped = prepare_params_for_kernel(params)      # one-time prep, off the hot path
    x = jax.random.normal(xkey, (batch, input_size), jnp.float32)

    fwd = jax.jit(functools.partial(nn_forward, output_size=output_size))
    y = fwd(prepped, x)
    jax.block_until_ready(y)

    # Reference mirroring the kernel's numerics: bf16 dot operands (weights and
    # activations rounded to bf16), exact-f32 multiply/accumulate, f32 epilogue.
    ref = x
    for i, (w, b) in enumerate(params):
        w_f = w.astype(jnp.bfloat16).astype(jnp.float32)
        a_f = ref.astype(jnp.bfloat16).astype(jnp.float32)
        ref = jnp.dot(a_f, w_f.T, precision=jax.lax.Precision.HIGHEST) + b
        if i < len(params) - 1:
            ref = jnp.maximum(ref, 0.0)

    assert y.shape == (batch, output_size)
    assert jnp.allclose(y, ref, atol=1e-4, rtol=1e-4)

    print("KERNEL_OK")
</pallas_src>

<mosaic_0001>
module attributes {stable_mosaic.version = 11 : i64} {
  func.func @_mlp_fused_kernel(%arg0: i32, %arg1: memref<8x32xf32, #tpu.memory_space<vmem>>, %arg2: memref<32x128xbf16, #tpu.memory_space<vmem>>, %arg3: memref<1x128xf32, #tpu.memory_space<vmem>>, %arg4: memref<128x128xbf16, #tpu.memory_space<vmem>>, %arg5: memref<1x128xf32, #tpu.memory_space<vmem>>, %arg6: memref<128x128xbf16, #tpu.memory_space<vmem>>, %arg7: memref<1x128xf32, #tpu.memory_space<vmem>>, %arg8: memref<8x128xf32, #tpu.memory_space<vmem>>) attributes {dimension_semantics = [#tpu.dimension_semantics<parallel>], iteration_bounds = array<i64: 1>, scalar_prefetch = 0 : i64, scratch_operands = 0 : i64, tpu.core_type = #tpu.core_type<tc>, window_params = [{transform_indices = @transform_0, window_bounds = array<i64: 8, 32>}, {pipeline_mode = #tpu.pipeline_mode<synchronous>, transform_indices = @transform_1, window_bounds = array<i64: 32, 128>}, {pipeline_mode = #tpu.pipeline_mode<synchronous>, transform_indices = @transform_2, window_bounds = array<i64: 1, 128>}, {pipeline_mode = #tpu.pipeline_mode<synchronous>, transform_indices = @transform_3, window_bounds = array<i64: 128, 128>}, {pipeline_mode = #tpu.pipeline_mode<synchronous>, transform_indices = @transform_4, window_bounds = array<i64: 1, 128>}, {pipeline_mode = #tpu.pipeline_mode<synchronous>, transform_indices = @transform_5, window_bounds = array<i64: 128, 128>}, {pipeline_mode = #tpu.pipeline_mode<synchronous>, transform_indices = @transform_6, window_bounds = array<i64: 1, 128>}, {transform_indices = @transform_7, window_bounds = array<i64: 8, 128>}]} {
    %c0 = arith.constant 0 : index
    %c0_0 = arith.constant 0 : index
    %0 = vector.load %arg1[%c0, %c0_0] : memref<8x32xf32, #tpu.memory_space<vmem>>, vector<8x32xf32>
    %c0_1 = arith.constant 0 : index
    %c0_2 = arith.constant 0 : index
    %1 = vector.load %arg2[%c0_1, %c0_2] : memref<32x128xbf16, #tpu.memory_space<vmem>>, vector<32x128xbf16>
    %c0_3 = arith.constant 0 : index
    %c0_4 = arith.constant 0 : index
    %2 = vector.load %arg3[%c0_3, %c0_4] : memref<1x128xf32, #tpu.memory_space<vmem>>, vector<1x128xf32>
    %3 = arith.truncf %0 : vector<8x32xf32> to vector<8x32xbf16>
    %cst = arith.constant dense<0.000000e+00> : vector<8x128xf32>
    %4 = tpu.matmul %3, %1, %cst {dimension_numbers = #tpu.dot_dimension_numbers<[1], [0], [0], [1], [0, 0, 1, 1], [], []>} : vector<8x32xbf16>, vector<32x128xbf16>, vector<8x128xf32> -> vector<8x128xf32>
    %5 = vector.broadcast %2 : vector<1x128xf32> to vector<8x128xf32>
    %6 = arith.addf %4, %5 : vector<8x128xf32>
    %cst_5 = arith.constant 0.000000e+00 : f32
    %7 = vector.broadcast %cst_5 : f32 to vector<8x128xf32>
    %8 = arith.maximumf %6, %7 : vector<8x128xf32>
    %c0_6 = arith.constant 0 : index
    %c0_7 = arith.constant 0 : index
    %9 = vector.load %arg4[%c0_6, %c0_7] : memref<128x128xbf16, #tpu.memory_space<vmem>>, vector<128x128xbf16>
    %c0_8 = arith.constant 0 : index
    %c0_9 = arith.constant 0 : index
    %10 = vector.load %arg5[%c0_8, %c0_9] : memref<1x128xf32, #tpu.memory_space<vmem>>, vector<1x128xf32>
    %11 = arith.truncf %8 : vector<8x128xf32> to vector<8x128xbf16>
    %cst_10 = arith.constant dense<0.000000e+00> : vector<8x128xf32>
    %12 = tpu.matmul %11, %9, %cst_10 {dimension_numbers = #tpu.dot_dimension_numbers<[1], [0], [0], [1], [0, 0, 1, 1], [], []>} : vector<8x128xbf16>, vector<128x128xbf16>, vector<8x128xf32> -> vector<8x128xf32>
    %13 = vector.broadcast %10 : vector<1x128xf32> to vector<8x128xf32>
    %14 = arith.addf %12, %13 : vector<8x128xf32>
    %cst_11 = arith.constant 0.000000e+00 : f32
    %15 = vector.broadcast %cst_11 : f32 to vector<8x128xf32>
    %16 = arith.maximumf %14, %15 : vector<8x128xf32>
    %c0_12 = arith.constant 0 : index
    %c0_13 = arith.constant 0 : index
    %17 = vector.load %arg6[%c0_12, %c0_13] : memref<128x128xbf16, #tpu.memory_space<vmem>>, vector<128x128xbf16>
    %c0_14 = arith.constant 0 : index
    %c0_15 = arith.constant 0 : index
    %18 = vector.load %arg7[%c0_14, %c0_15] : memref<1x128xf32, #tpu.memory_space<vmem>>, vector<1x128xf32>
    %19 = arith.truncf %16 : vector<8x128xf32> to vector<8x128xbf16>
    %cst_16 = arith.constant dense<0.000000e+00> : vector<8x128xf32>
    %20 = tpu.matmul %19, %17, %cst_16 {dimension_numbers = #tpu.dot_dimension_numbers<[1], [0], [0], [1], [0, 0, 1, 1], [], []>} : vector<8x128xbf16>, vector<128x128xbf16>, vector<8x128xf32> -> vector<8x128xf32>
    %21 = vector.broadcast %18 : vector<1x128xf32> to vector<8x128xf32>
    %22 = arith.addf %20, %21 : vector<8x128xf32>
    %c0_17 = arith.constant 0 : index
    %c0_18 = arith.constant 0 : index
    %23 = vector.load %arg8[%c0_17, %c0_18] : memref<8x128xf32, #tpu.memory_space<vmem>>, vector<8x128xf32>
    tpu.vector_store %arg8[%c0_17, %c0_18], %22 {strides = array<i32>} : memref<8x128xf32, #tpu.memory_space<vmem>>, vector<8x128xf32>,
    return
  }
  func.func @transform_0(%arg0: i32) -> (i32, i32) {
    %c0_i32 = arith.constant 0 : i32
    %c0_i32_0 = arith.constant 0 : i32
    return %arg0, %c0_i32 : i32, i32
  }
  func.func @transform_1(%arg0: i32) -> (i32, i32) {
    %c0_i32 = arith.constant 0 : i32
    %c0_i32_0 = arith.constant 0 : i32
    %c0_i32_1 = arith.constant 0 : i32
    return %c0_i32, %c0_i32_0 : i32, i32
  }
  func.func @transform_2(%arg0: i32) -> (i32, i32) {
    %c0_i32 = arith.constant 0 : i32
    %c0_i32_0 = arith.constant 0 : i32
    %c0_i32_1 = arith.constant 0 : i32
    return %c0_i32, %c0_i32_0 : i32, i32
  }
  func.func @transform_3(%arg0: i32) -> (i32, i32) {
    %c0_i32 = arith.constant 0 : i32
    %c0_i32_0 = arith.constant 0 : i32
    %c0_i32_1 = arith.constant 0 : i32
    return %c0_i32, %c0_i32_0 : i32, i32
  }
  func.func @transform_4(%arg0: i32) -> (i32, i32) {
    %c0_i32 = arith.constant 0 : i32
    %c0_i32_0 = arith.constant 0 : i32
    %c0_i32_1 = arith.constant 0 : i32
    return %c0_i32, %c0_i32_0 : i32, i32
  }
  func.func @transform_5(%arg0: i32) -> (i32, i32) {
    %c0_i32 = arith.constant 0 : i32
    %c0_i32_0 = arith.constant 0 : i32
    %c0_i32_1 = arith.constant 0 : i32
    return %c0_i32, %c0_i32_0 : i32, i32
  }
  func.func @transform_6(%arg0: i32) -> (i32, i32) {
    %c0_i32 = arith.constant 0 : i32
    %c0_i32_0 = arith.constant 0 : i32
    %c0_i32_1 = arith.constant 0 : i32
    return %c0_i32, %c0_i32_0 : i32, i32
  }
  func.func @transform_7(%arg0: i32) -> (i32, i32) {
    %c0_i32 = arith.constant 0 : i32
    %c0_i32_0 = arith.constant 0 : i32
    return %arg0, %c0_i32 : i32, i32
  }
}

</mosaic_0001>

<llo_original>
// kernel: nn_forward.1
$region0: #{nn_forward.1}
  #allocation0 [shape = 'u32[]', space=smem, size = 0x4, offset = 0x4, fixed_abs, tag = 'smem constant byte address 0x4 - core index']
  #allocation1 [shape = 'u32[144,128]{1,0:T(1,128)}', space=vmem, size = 0x12000, scoped, tag = 'internal scratch']
  %s0 = inlined_call_operand.vmem [shape: f32[8,32], index: 0, kind: input, shape index: {}]
  %s1 = inlined_call_operand.hbm [shape: bf16[32,128], index: 1, kind: input, shape index: {}]
  %s2 = inlined_call_operand.vmem [shape: f32[1,128], index: 2, kind: input, shape index: {}]
  %s3 = inlined_call_operand.hbm [shape: bf16[128,128], index: 3, kind: input, shape index: {}]
  %s4 = inlined_call_operand.vmem [shape: f32[1,128], index: 4, kind: input, shape index: {}]
  %s5 = inlined_call_operand.hbm [shape: bf16[128,128], index: 5, kind: input, shape index: {}]
  %s6 = inlined_call_operand.hbm [shape: f32[1,128], index: 6, kind: input, shape index: {}]
  %s7 = inlined_call_operand.hbm [shape: f32[8,128], index: 7, kind: output, shape index: {}]
  %s8 = sld [smem:[#allocation0]]
  $region54: #{nn_forward.1} parent=0
    _
  %s10 = ssub.s32 1, %s8
  %s11 = scalar_select 0, %s10, %s8
  $region1: #{nn_forward.1} parent=0
    #allocation2 [shape = 'u8[8192]{0}', space=vmem, size = 0x2000, scoped, tag = 'input window, operand 1, single buffered']
    #allocation3 [shape = 's32[1]{0}', space=sflag, size = 0x4, scoped, tag = 'scoped memory for nn_forward.1']
    #allocation4 [shape = 's32[1]{0}', space=sflag, size = 0x4, scoped, tag = 'scoped memory for nn_forward.1']
    #allocation5 [shape = 'u8[32768]{0}', space=vmem, size = 0x8000, scoped, tag = 'input window, operand 3, single buffered']
    #allocation6 [shape = 's32[1]{0}', space=sflag, size = 0x4, scoped, tag = 'scoped memory for nn_forward.1']
    #allocation7 [shape = 'u8[32768]{0}', space=vmem, size = 0x8000, scoped, tag = 'input window, operand 5, single buffered']
    #allocation8 [shape = 'u8[512]{0}', space=vmem, size = 0x400, scoped, tag = 'input window, operand 6, single buffered']
    #allocation9 [shape = 's32[1]{0}', space=sflag, size = 0x4, scoped, tag = 'scoped memory for nn_forward.1']
    #allocation10 [shape = 'u8[4096]{0}', space=vmem, size = 0x1000, scoped, tag = 'output window, operand 0, single buffered']
    %12 = vsyncpa [#allocation3], 0
    %13 = vsyncpa [#allocation6], 0
    %14 = vsyncpa [#allocation9], 0
    %15 = vsyncpa [#allocation4], 0
    // Predicated region
    $region2: #{nn_forward.1} parent=1 // pred_check
      _
    $region3: #{nn_forward.1} parent=1 // pred_check_branch
      %17 = sbr.rel (0) target = $region5
    $region4: #{nn_forward.1} parent=1 // pred_region
      _
    $region5: #{nn_forward.1} parent=1 // pred_fallthru
      _
    // Predicated region
    $region6: #{nn_forward.1} parent=1 // pred_check
      _
    $region7: #{nn_forward.1} parent=1 // pred_check_branch
      %19 = sbr.rel (0) target = $region9
    $region8: #{nn_forward.1} parent=1 // pred_region
      %s21 = ssub.s32 256, 256
      %22 = vsyncadd [#allocation3], %s21
      %s23 = sshll.u32 [#allocation2], 4
      %s24 = int_to_ptr.vmem [resolvable:$true] %s23
      %29 = dma.hbm_to_vmem [thread:$0]  %s1, 256, %s24, [#allocation3], 64, 64, 4
    $region9: #{nn_forward.1} parent=1 // pred_fallthru
      _
    // Predicated region
    $region10: #{nn_forward.1} parent=1 // pred_check
      _
    $region11: #{nn_forward.1} parent=1 // pred_check_branch
      %31 = sbr.rel (0) target = $region13
    $region12: #{nn_forward.1} parent=1 // pred_region
      _
    $region13: #{nn_forward.1} parent=1 // pred_fallthru
      _
    // Predicated region
    $region14: #{nn_forward.1} parent=1 // pred_check
      _
    $region15: #{nn_forward.1} parent=1 // pred_check_branch
      %33 = sbr.rel (0) target = $region17
    $region16: #{nn_forward.1} parent=1 // pred_region
      %s35 = ssub.s32 1024, 1024
      %36 = vsyncadd [#allocation6], %s35
      %s37 = sshll.u32 [#allocation5], 4
      %s38 = int_to_ptr.vmem [resolvable:$true] %s37
      %43 = dma.hbm_to_vmem [thread:$0]  %s3, 1024, %s38, [#allocation6], 64, 64, 4
    $region17: #{nn_forward.1} parent=1 // pred_fallthru
      _
    // Predicated region
    $region18: #{nn_forward.1} parent=1 // pred_check
      _
    $region19: #{nn_forward.1} parent=1 // pred_check_branch
      %45 = sbr.rel (0) target = $region21
    $region20: #{nn_forward.1} parent=1 // pred_region
      _
    $region21: #{nn_forward.1} parent=1 // pred_fallthru
      _
    // Predicated region
    $region22: #{nn_forward.1} parent=1 // pred_check
      _
    $region23: #{nn_forward.1} parent=1 // pred_check_branch
      %47 = sbr.rel (0) target = $region25
    $region24: #{nn_forward.1} parent=1 // pred_region
      %s49 = ssub.s32 1024, 1024
      %50 = vsyncadd [#allocation6], %s49
      %s51 = sshll.u32 [#allocation7], 4
      %s52 = int_to_ptr.vmem [resolvable:$true] %s51
      %57 = dma.hbm_to_vmem [thread:$0]  %s5, 1024, %s52, [#allocation6], 64, 64, 4
    $region25: #{nn_forward.1} parent=1 // pred_fallthru
      _
    // Predicated region
    $region26: #{nn_forward.1} parent=1 // pred_check
      _
    $region27: #{nn_forward.1} parent=1 // pred_check_branch
      %59 = sbr.rel (0) target = $region29
    $region28: #{nn_forward.1} parent=1 // pred_region
      %s61 = ssub.s32 16, 16
      %62 = vsyncadd [#allocation9], %s61
      %s64 = sshll.u32 [#allocation8], 4
      %s65 = int_to_ptr.vmem [resolvable:$true] %s64
      %67 = dma.hbm_to_vmem [thread:$0]  %s6, 16, %s65, [#allocation9]
    $region29: #{nn_forward.1} parent=1 // pred_fallthru
      _
    // Predicated region
    $region30: #{nn_forward.1} parent=1 // pred_check
      _
    $region31: #{nn_forward.1} parent=1 // pred_check_branch
      %69 = sbr.rel (0) target = $region33
    $region32: #{nn_forward.1} parent=1 // pred_region
      %70 = dma.done [#allocation3], 256
    $region33: #{nn_forward.1} parent=1 // pred_fallthru
      _
    // Predicated region
    $region34: #{nn_forward.1} parent=1 // pred_check
      _
    $region35: #{nn_forward.1} parent=1 // pred_check_branch
      %72 = sbr.rel (0) target = $region37
    $region36: #{nn_forward.1} parent=1 // pred_region
      %73 = dma.done [#allocation6], 1024
    $region37: #{nn_forward.1} parent=1 // pred_fallthru
      _
    // Predicated region
    $region38: #{nn_forward.1} parent=1 // pred_check
      _
    $region39: #{nn_forward.1} parent=1 // pred_check_branch
      %75 = sbr.rel (0) target = $region41
    $region40: #{nn_forward.1} parent=1 // pred_region
      %76 = dma.done [#allocation6], 1024
    $region41: #{nn_forward.1} parent=1 // pred_fallthru
      _
    // Predicated region
    $region42: #{nn_forward.1} parent=1 // pred_check
      _
    $region43: #{nn_forward.1} parent=1 // pred_check_branch
      %78 = sbr.rel (0) target = $region45
    $region44: #{nn_forward.1} parent=1 // pred_region
      %79 = dma.done [#allocation9], 16
    $region45: #{nn_forward.1} parent=1 // pred_fallthru
      _
    %v81 = vld [vmem:[%s0] sm:$0xff]
    %v82 = vld [vmem:[#allocation2] sm:$0xf]
    %v83 = vld [vmem:[#allocation2 + $0x4] sm:$0xf]
    %v84 = vld [vmem:[#allocation2 + $0x8] sm:$0xf]
    %v85 = vld [vmem:[#allocation2 + $0xc] sm:$0xf]
    %v86 = vld [vmem:[%s2] sm:$0x1]
    %v87 = vpack.c.bf16 %v81, %v81
    %v89 = vlaneseq
    %v90 = vshrl.u32 %v89, 7
    %v91 = vsub.s32 0, %v90
    %v92 = vrot.slane %v86, %v91
    %v98 = vunpack.c.l.b16 %v82
    %v99 = vunpack.c.l.b16 %v83
    %v100 = vunpack.c.l.b16 %v84
    %v101 = vunpack.c.l.b16 %v85
    %v102 = vpack.c.b16 %v99, %v98
    %v103 = vpack.c.b16 %v101, %v100
    %vm106 = vcmask 261120
    %v108 = vsel %vm106, %v87, 0
    %110 = vmatprep.subr.bf16.mxu0 0
    %111 = vmatpush1.bf16.msra.mxu0 0
    %112 = vmatprep.subr.bf16.mxu0 0
    %113 = vmatpush1.bf16.msra.mxu0 0
    %114 = vmatprep.subr.bf16.mxu0 0
    %115 = vmatpush1.bf16.msra.mxu0 0
    %116 = vmatprep.subr.bf16.mxu0 0
    %117 = vmatpush1.bf16.msra.mxu0 0
    %118 = vmatprep.subr.bf16.mxu0 0
    %119 = vmatpush1.bf16.msra.mxu0 0
    %120 = vmatprep.subr.bf16.mxu0 0
    %121 = vmatpush1.bf16.msra.mxu0 0
    %122 = vmatprep.subr.bf16.mxu0 0
    %123 = vmatpush1.bf16.msra.mxu0 %v103
    %124 = vmatprep.subr.bf16.mxu0 0
    %125 = vmatpush1.bf16.msra.mxu0 %v102
    %126 = vmatprep.subr.bf16.mxu0 0
    %127 = vmatpush2.bf16.msra.mxu0 0
    %128 = vmatprep.subr.bf16.mxu0 0
    %129 = vmatpush2.bf16.msra.mxu0 0
    %130 = vmatprep.subr.bf16.mxu0 0
    %131 = vmatpush2.bf16.msra.mxu0 0
    %132 = vmatprep.subr.bf16.mxu0 0
    %133 = vmatpush2.bf16.msra.mxu0 0
    %134 = vmatprep.subr.bf16.mxu0 0
    %135 = vmatpush2.bf16.msra.mxu0 0
    %136 = vmatprep.subr.bf16.mxu0 0
    %137 = vmatpush2.bf16.msra.mxu0 0
    %138 = vmatprep.subr.bf16.mxu0 0
    %139 = vmatpush2.bf16.msra.mxu0 0
    %140 = vmatprep.subr.bf16.mxu0 0
    %141 = vmatpush2.bf16.msra.mxu0 0
    %142 = vmatprep.mubr.bf16.mxu0 0
    %143 = vmatmul.mubr.bf16.gmra.mxu0 %v108
    %v144 = vpop.f32.mrf.mxu0
    %v145 = vadd.f32 %v92, %v144
    %v146 = vpop.f32.mrf.mxu0
    %v147 = vpop.f32.mrf.mxu0
    %v148 = vpop.f32.mrf.mxu0
    %149 = vdwg.mxu0
    %v150 = vmax.f32 %v145, 0.0
    %v151 = vld [vmem:[#allocation5] sm:$0xf]
    %v152 = vld [vmem:[#allocation5 + $0x4] sm:$0xf]
    %v153 = vld [vmem:[#allocation5 + $0x8] sm:$0xf]
    %v154 = vld [vmem:[#allocation5 + $0xc] sm:$0xf]
    %v155 = vld [vmem:[#allocation5 + $0x10] sm:$0xf]
    %v156 = vld [vmem:[#allocation5 + $0x14] sm:$0xf]
    %v157 = vld [vmem:[#allocation5 + $0x18] sm:$0xf]
    %v158 = vld [vmem:[#allocation5 + $0x1c] sm:$0xf]
    %v159 = vld [vmem:[#allocation5 + $0x20] sm:$0xf]
    %v160 = vld [vmem:[#allocation5 + $0x24] sm:$0xf]
    %v161 = vld [vmem:[#allocation5 + $0x28] sm:$0xf]
    %v162 = vld [vmem:[#allocation5 + $0x2c] sm:$0xf]
    %v163 = vld [vmem:[#allocation5 + $0x30] sm:$0xf]
    %v164 = vld [vmem:[#allocation5 + $0x34] sm:$0xf]
    %v165 = vld [vmem:[#allocation5 + $0x38] sm:$0xf]
    %v166 = vld [vmem:[#allocation5 + $0x3c] sm:$0xf]
    %v167 = vld [vmem:[%s4] sm:$0x1]
    %v168 = vpack.c.bf16 %v150, %v150
    %v170 = vlaneseq
    %v171 = vshrl.u32 %v170, 7
    %v172 = vsub.s32 0, %v171
    %v173 = vrot.slane %v167, %v172
    %v191 = vunpack.c.l.b16 %v151
    %v192 = vunpack.c.l.b16 %v152
    %v193 = vunpack.c.l.b16 %v153
    %v194 = vunpack.c.l.b16 %v154
    %v195 = vunpack.c.l.b16 %v155
    %v196 = vunpack.c.l.b16 %v156
    %v197 = vunpack.c.l.b16 %v157
    %v198 = vunpack.c.l.b16 %v158
    %v199 = vunpack.c.l.b16 %v159
    %v200 = vunpack.c.l.b16 %v160
    %v201 = vunpack.c.l.b16 %v161
    %v202 = vunpack.c.l.b16 %v162
    %v203 = vunpack.c.l.b16 %v163
    %v204 = vunpack.c.l.b16 %v164
    %v205 = vunpack.c.l.b16 %v165
    %v206 = vunpack.c.l.b16 %v166
    %v207 = vpack.c.b16 %v192, %v191
    %v208 = vpack.c.b16 %v194, %v193
    %v209 = vpack.c.b16 %v196, %v195
    %v210 = vpack.c.b16 %v198, %v197
    %v211 = vpack.c.b16 %v200, %v199
    %v212 = vpack.c.b16 %v202, %v201
    %v213 = vpack.c.b16 %v204, %v203
    %v214 = vpack.c.b16 %v206, %v205
    %223 = vmatprep.subr.bf16.mxu0 0
    %224 = vmatpush1.bf16.msra.mxu0 %v214
    %225 = vmatprep.subr.bf16.mxu0 0
    %226 = vmatpush1.bf16.msra.mxu0 %v213
    %227 = vmatprep.subr.bf16.mxu0 0
    %228 = vmatpush1.bf16.msra.mxu0 %v212
    %229 = vmatprep.subr.bf16.mxu0 0
    %230 = vmatpush1.bf16.msra.mxu0 %v211
    %231 = vmatprep.subr.bf16.mxu0 0
    %232 = vmatpush1.bf16.msra.mxu0 %v210
    %233 = vmatprep.subr.bf16.mxu0 0
    %234 = vmatpush1.bf16.msra.mxu0 %v209
    %235 = vmatprep.subr.bf16.mxu0 0
    %236 = vmatpush1.bf16.msra.mxu0 %v208
    %237 = vmatprep.subr.bf16.mxu0 0
    %238 = vmatpush1.bf16.msra.mxu0 %v207
    %239 = vmatprep.subr.bf16.mxu0 0
    %240 = vmatpush2.bf16.msra.mxu0 0
    %241 = vmatprep.subr.bf16.mxu0 0
    %242 = vmatpush2.bf16.msra.mxu0 0
    %243 = vmatprep.subr.bf16.mxu0 0
    %244 = vmatpush2.bf16.msra.mxu0 0
    %245 = vmatprep.subr.bf16.mxu0 0
    %246 = vmatpush2.bf16.msra.mxu0 0
    %247 = vmatprep.subr.bf16.mxu0 0
    %248 = vmatpush2.bf16.msra.mxu0 0
    %249 = vmatprep.subr.bf16.mxu0 0
    %250 = vmatpush2.bf16.msra.mxu0 0
    %251 = vmatprep.subr.bf16.mxu0 0
    %252 = vmatpush2.bf16.msra.mxu0 0
    %253 = vmatprep.subr.bf16.mxu0 0
    %254 = vmatpush2.bf16.msra.mxu0 0
    %255 = vmatprep.mubr.bf16.mxu0 0
    %256 = vmatmul.mubr.bf16.gmra.mxu0 %v168
    %v257 = vpop.f32.mrf.mxu0
    %v258 = vadd.f32 %v173, %v257
    %v259 = vpop.f32.mrf.mxu0
    %v260 = vpop.f32.mrf.mxu0
    %v261 = vpop.f32.mrf.mxu0
    %262 = vdwg.mxu0
    %v263 = vmax.f32 %v258, 0.0
    %v264 = vld [vmem:[#allocation7] sm:$0xf]
    %v265 = vld [vmem:[#allocation7 + $0x4] sm:$0xf]
    %v266 = vld [vmem:[#allocation7 + $0x8] sm:$0xf]
    %v267 = vld [vmem:[#allocation7 + $0xc] sm:$0xf]
    %v268 = vld [vmem:[#allocation7 + $0x10] sm:$0xf]
    %v269 = vld [vmem:[#allocation7 + $0x14] sm:$0xf]
    %v270 = vld [vmem:[#allocation7 + $0x18] sm:$0xf]
    %v271 = vld [vmem:[#allocation7 + $0x1c] sm:$0xf]
    %v272 = vld [vmem:[#allocation7 + $0x20] sm:$0xf]
    %v273 = vld [vmem:[#allocation7 + $0x24] sm:$0xf]
    %v274 = vld [vmem:[#allocation7 + $0x28] sm:$0xf]
    %v275 = vld [vmem:[#allocation7 + $0x2c] sm:$0xf]
    %v276 = vld [vmem:[#allocation7 + $0x30] sm:$0xf]
    %v277 = vld [vmem:[#allocation7 + $0x34] sm:$0xf]
    %v278 = vld [vmem:[#allocation7 + $0x38] sm:$0xf]
    %v279 = vld [vmem:[#allocation7 + $0x3c] sm:$0xf]
    %v280 = vld [vmem:[#allocation8] sm:$0x1]
    %v281 = vpack.c.bf16 %v263, %v263
    %v283 = vlaneseq
    %v284 = vshrl.u32 %v283, 7
    %v285 = vsub.s32 0, %v284
    %v286 = vrot.slane %v280, %v285
    %v304 = vunpack.c.l.b16 %v264
    %v305 = vunpack.c.l.b16 %v265
    %v306 = vunpack.c.l.b16 %v266
    %v307 = vunpack.c.l.b16 %v267
    %v308 = vunpack.c.l.b16 %v268
    %v309 = vunpack.c.l.b16 %v269
    %v310 = vunpack.c.l.b16 %v270
    %v311 = vunpack.c.l.b16 %v271
    %v312 = vunpack.c.l.b16 %v272
    %v313 = vunpack.c.l.b16 %v273
    %v314 = vunpack.c.l.b16 %v274
    %v315 = vunpack.c.l.b16 %v275
    %v316 = vunpack.c.l.b16 %v276
    %v317 = vunpack.c.l.b16 %v277
    %v318 = vunpack.c.l.b16 %v278
    %v319 = vunpack.c.l.b16 %v279
    %v320 = vpack.c.b16 %v305, %v304
    %v321 = vpack.c.b16 %v307, %v306
    %v322 = vpack.c.b16 %v309, %v308
    %v323 = vpack.c.b16 %v311, %v310
    %v324 = vpack.c.b16 %v313, %v312
    %v325 = vpack.c.b16 %v315, %v314
    %v326 = vpack.c.b16 %v317, %v316
    %v327 = vpack.c.b16 %v319, %v318
    %336 = vmatprep.subr.bf16.mxu0 0
    %337 = vmatpush1.bf16.msra.mxu0 %v327
    %338 = vmatprep.subr.bf16.mxu0 0
    %339 = vmatpush1.bf16.msra.mxu0 %v326
    %340 = vmatprep.subr.bf16.mxu0 0
    %341 = vmatpush1.bf16.msra.mxu0 %v325
    %342 = vmatprep.subr.bf16.mxu0 0
    %343 = vmatpush1.bf16.msra.mxu0 %v324
    %344 = vmatprep.subr.bf16.mxu0 0
    %345 = vmatpush1.bf16.msra.mxu0 %v323
    %346 = vmatprep.subr.bf16.mxu0 0
    %347 = vmatpush1.bf16.msra.mxu0 %v322
    %348 = vmatprep.subr.bf16.mxu0 0
    %349 = vmatpush1.bf16.msra.mxu0 %v321
    %350 = vmatprep.subr.bf16.mxu0 0
    %351 = vmatpush1.bf16.msra.mxu0 %v320
    %352 = vmatprep.subr.bf16.mxu0 0
    %353 = vmatpush2.bf16.msra.mxu0 0
    %354 = vmatprep.subr.bf16.mxu0 0
    %355 = vmatpush2.bf16.msra.mxu0 0
    %356 = vmatprep.subr.bf16.mxu0 0
    %357 = vmatpush2.bf16.msra.mxu0 0
    %358 = vmatprep.subr.bf16.mxu0 0
    %359 = vmatpush2.bf16.msra.mxu0 0
    %360 = vmatprep.subr.bf16.mxu0 0
    %361 = vmatpush2.bf16.msra.mxu0 0
    %362 = vmatprep.subr.bf16.mxu0 0
    %363 = vmatpush2.bf16.msra.mxu0 0
    %364 = vmatprep.subr.bf16.mxu0 0
    %365 = vmatpush2.bf16.msra.mxu0 0
    %366 = vmatprep.subr.bf16.mxu0 0
    %367 = vmatpush2.bf16.msra.mxu0 0
    %368 = vmatprep.mubr.bf16.mxu0 0
    %369 = vmatmul.mubr.bf16.gmra.mxu0 %v281
    %v370 = vpop.f32.mrf.mxu0
    %v371 = vadd.f32 %v286, %v370
    %v372 = vpop.f32.mrf.mxu0
    %v373 = vpop.f32.mrf.mxu0
    %v374 = vpop.f32.mrf.mxu0
    %375 = vdwg.mxu0
    %376 = vst [vmem:[#allocation10] sm:$0xff] %v371
    // Predicated region
    $region46: #{nn_forward.1} parent=1 // pred_check
      _
    $region47: #{nn_forward.1} parent=1 // pred_check_branch
      %378 = sbr.rel (0) target = $region49
    $region48: #{nn_forward.1} parent=1 // pred_region
      %s380 = ssub.s32 128, 128
      %381 = vsyncadd [#allocation4], %s380
      %s383 = sshll.u32 [#allocation10], 4
      %s384 = int_to_ptr.vmem [resolvable:$true] %s383
      %386 = dma.vmem_to_hbm [thread:$0]  %s384, 128, %s7, [#allocation4]
    $region49: #{nn_forward.1} parent=1 // pred_fallthru
      _
    // Predicated region
    $region50: #{nn_forward.1} parent=1 // pred_check
      _
    $region51: #{nn_forward.1} parent=1 // pred_check_branch
      %388 = sbr.rel (0) target = $region53
    $region52: #{nn_forward.1} parent=1 // pred_region
      %389 = dma.done [#allocation4], 128
    $region53: #{nn_forward.1} parent=1 // pred_fallthru
      _
    %390 = vsyncpa [#allocation3], 1
    %391 = vsyncpa [#allocation6], 1
    %392 = vsyncpa [#allocation9], 1
    %393 = vsyncpa [#allocation4], 1

</llo_original>
